<compile_context>
chip_gen: v6e
topology: v6e:2x2x1
jax: 0.10.0
libtpu: 0.0.40
codegen_flags: <defaults>
</compile_context>

<pallas_src>
import functools

import jax
import jax.numpy as jnp
from jax import lax
from jax.experimental import pallas as pl
from jax.experimental.pallas import tpu as pltpu

KH = KW = 3
EPS = 1e-5  # PyTorch BatchNorm2d default


def _round_up(x, m):
    return ((x + m - 1) // m) * m


# --------------------------------------------------------------------------
# Single-pass fused kernel (small problems: everything lives in VMEM).
# --------------------------------------------------------------------------
def _fused_single_kernel(p_ref, w_ref, o_ref, y_scr, *, n_imgs, hw, hw_pad):
    # p_ref : (N, Kpad, HW_pad)  im2col patches (operand dtype)
    # w_ref : (Cout_pad8, Kpad)  flattened conv weight (operand dtype)
    # o_ref : (N, Cout_pad8, HW_pad) f32 output
    # y_scr : (N, Cout_pad8, HW_pad) f32 scratch holding the raw conv output
    cp8 = w_ref.shape[0]
    total = float(n_imgs * hw)
    pad_lanes = float(n_imgs * (hw_pad - hw))

    # Conv (one MXU contraction per image) + per-channel sums.
    s = jnp.zeros((cp8, 1), jnp.float32)
    for n in range(n_imgs):
        y = jnp.dot(w_ref[...], p_ref[n], preferred_element_type=jnp.float32)
        y_scr[n] = y
        s = s + jnp.sum(y, axis=1, keepdims=True)
    mean = s / total

    # True two-pass variance (mean subtracted before squaring).
    m2 = jnp.zeros((cp8, 1), jnp.float32)
    for n in range(n_imgs):
        d = y_scr[n] - mean
        m2 = m2 + jnp.sum(d * d, axis=1, keepdims=True)
    # Padded spatial lanes hold exactly 0 -> each contributed exactly mean^2.
    m2 = m2 - pad_lanes * mean * mean

    inv_std = lax.rsqrt(m2 / total + EPS)
    shift = -mean * inv_std
    for n in range(n_imgs):
        o_ref[n] = jnp.maximum(y_scr[n] * inv_std + shift, 0.0).astype(o_ref.dtype)


# --------------------------------------------------------------------------
# Two-pass kernels (general case).
# --------------------------------------------------------------------------
def _conv_stats_kernel(p_ref, w_ref, mean_ref, m2_ref, *, hw, tile_hw, nblk):
    # p_ref : (1, Kpad, tile_hw); w_ref: (Cout_pad8, Kpad)
    # mean_ref / m2_ref : (1, Cout_pad8, 128) per-tile BN statistics.
    i = pl.program_id(1)
    y = jnp.dot(w_ref[...], p_ref[0], preferred_element_type=jnp.float32)
    cp8 = y.shape[0]

    last = hw - (nblk - 1) * tile_hw
    count = jnp.where(i == nblk - 1, last, tile_hw).astype(jnp.float32)

    s = jnp.sum(y, axis=1, keepdims=True)                 # XLU cross-lane reduce
    mean_t = s / count
    d = y - mean_t
    m2 = jnp.sum(d * d, axis=1, keepdims=True)
    # Padded lanes are exactly 0 -> deviation is exactly -mean_t; remove them.
    m2 = m2 - (jnp.float32(tile_hw) - count) * mean_t * mean_t

    mean_ref[0] = jnp.broadcast_to(mean_t, (cp8, 128))
    m2_ref[0] = jnp.broadcast_to(m2, (cp8, 128))


def _conv_bn_relu_kernel(p_ref, w_ref, scale_ref, shift_ref, o_ref):
    # Recompute the conv (cheap: K = 9*Cin deep), then normalize + ReLU.
    y = jnp.dot(w_ref[...], p_ref[0], preferred_element_type=jnp.float32)
    o_ref[0] = jnp.maximum(y * scale_ref[...] + shift_ref[...], 0.0).astype(o_ref.dtype)


# --------------------------------------------------------------------------
# Wrapper.
# --------------------------------------------------------------------------
def basic_layer(x_nchw, weight_oihw, *, operand_dtype=jnp.float32,
                max_tile_hw=2048, vmem_limit_bytes=32 * 1024 * 1024,
                force_two_pass=False):
    """x_nchw: (N, Cin, H, W); weight_oihw: (Cout, Cin, 3, 3).
    Returns (N, Cout, H, W) f32 matching the PyTorch module in train mode."""
    N, Cin, H, W = x_nchw.shape
    Cout = weight_oihw.shape[0]
    HW = H * W
    K = KH * KW * Cin
    Kpad = _round_up(K, 8)          # sublane pad only
    cp8 = _round_up(Cout, 8)        # sublane pad only (was 128-lane pad before)

    # ---- im2col directly in NCHW order -> (N, K, HW): spatial axis last so
    # every kernel load/store is lane-dense and the output is NCHW-ordered.
    xf = x_nchw.astype(jnp.float32)
    xp = jnp.pad(xf, ((0, 0), (0, 0), (1, 1), (1, 1)))
    taps = [xp[:, :, kh:kh + H, kw:kw + W] for kh in range(KH) for kw in range(KW)]
    patches = jnp.concatenate(taps, axis=1).reshape(N, K, HW)

    # weight (Cout, Cin, KH, KW) -> (Cout, KH, KW, Cin) -> (Cout, K); K order
    # matches the tap-major / channel-minor order of the patches above.
    w2d = jnp.transpose(weight_oihw.astype(jnp.float32), (0, 2, 3, 1)).reshape(Cout, K)

    dsize = jnp.dtype(operand_dtype).itemsize
    hw128 = _round_up(HW, 128)
    single_pass_bytes = N * Kpad * hw128 * dsize + 2 * N * cp8 * hw128 * 4
    use_single = ((not force_two_pass) and single_pass_bytes <= 8 * 1024 * 1024
                  and N <= 32)

    if use_single:
        nblk = 1
        tile_hw = HW_pad = hw128
    else:
        # Pick the largest lane tile <= max_tile_hw that keeps padding small.
        nblk = pl.cdiv(hw128, max_tile_hw)
        tile_hw = _round_up(pl.cdiv(hw128, nblk), 128)
        nblk = pl.cdiv(HW, tile_hw)
        HW_pad = nblk * tile_hw

    patches = jnp.pad(patches, ((0, 0), (0, Kpad - K), (0, HW_pad - HW)))
    patches = patches.astype(operand_dtype)
    w2d = jnp.pad(w2d, ((0, cp8 - Cout), (0, Kpad - K))).astype(operand_dtype)

    if use_single:
        out = pl.pallas_call(
            functools.partial(_fused_single_kernel, n_imgs=N, hw=HW, hw_pad=HW_pad),
            out_shape=jax.ShapeDtypeStruct((N, cp8, HW_pad), jnp.float32),
            grid=(1,),
            in_specs=[
                pl.BlockSpec((N, Kpad, HW_pad), lambda i: (0, 0, 0)),
                pl.BlockSpec((cp8, Kpad), lambda i: (0, 0)),
            ],
            out_specs=pl.BlockSpec((N, cp8, HW_pad), lambda i: (0, 0, 0)),
            scratch_shapes=[pltpu.VMEM((N, cp8, HW_pad), jnp.float32)],
            compiler_params=pltpu.CompilerParams(
                dimension_semantics=("arbitrary",),
                vmem_limit_bytes=vmem_limit_bytes),
        )(patches, w2d)
    else:
        cparams = pltpu.CompilerParams(
            dimension_semantics=("parallel", "parallel"),
            vmem_limit_bytes=vmem_limit_bytes)

        # ---- pass 1: conv + per-tile (mean, M2); only tiny stats hit HBM.
        mean_t, m2_t = pl.pallas_call(
            functools.partial(_conv_stats_kernel, hw=HW, tile_hw=tile_hw, nblk=nblk),
            out_shape=(
                jax.ShapeDtypeStruct((N, nblk * cp8, 128), jnp.float32),
                jax.ShapeDtypeStruct((N, nblk * cp8, 128), jnp.float32),
            ),
            grid=(N, nblk),
            in_specs=[
                pl.BlockSpec((1, Kpad, tile_hw), lambda n, i: (n, 0, i)),
                pl.BlockSpec((cp8, Kpad), lambda n, i: (0, 0)),
            ],
            out_specs=(
                pl.BlockSpec((1, cp8, 128), lambda n, i: (n, i, 0)),
                pl.BlockSpec((1, cp8, 128), lambda n, i: (n, i, 0)),
            ),
            compiler_params=cparams,
        )(patches, w2d)

        # ---- Chan/Welford combine of per-tile (count, mean, M2) (wrapper, tiny).
        counts = jnp.array([min(tile_hw, HW - i * tile_hw) for i in range(nblk)],
                           dtype=jnp.float32).reshape(1, nblk, 1)
        mean_b = mean_t.reshape(N, nblk, cp8, 128)[..., 0]    # (N, nblk, cp8)
        m2_b = m2_t.reshape(N, nblk, cp8, 128)[..., 0]
        total = jnp.float32(N * HW)
        mean = jnp.sum(mean_b * counts, axis=(0, 1)) / total  # (cp8,)
        m2 = (jnp.sum(m2_b, axis=(0, 1))
              + jnp.sum(counts * (mean_b - mean) ** 2, axis=(0, 1)))
        inv_std = lax.rsqrt(m2 / total + EPS)
        scale = inv_std.reshape(cp8, 1)
        shift = (-mean * inv_std).reshape(cp8, 1)

        # ---- pass 2: recompute conv, normalize + ReLU, lane-dense NCHW stores.
        out = pl.pallas_call(
            _conv_bn_relu_kernel,
            out_shape=jax.ShapeDtypeStruct((N, cp8, HW_pad), jnp.float32),
            grid=(N, nblk),
            in_specs=[
                pl.BlockSpec((1, Kpad, tile_hw), lambda n, i: (n, 0, i)),
                pl.BlockSpec((cp8, Kpad), lambda n, i: (0, 0)),
                pl.BlockSpec((cp8, 1), lambda n, i: (0, 0)),
                pl.BlockSpec((cp8, 1), lambda n, i: (0, 0)),
            ],
            out_specs=pl.BlockSpec((1, cp8, tile_hw), lambda n, i: (n, 0, i)),
            compiler_params=cparams,
        )(patches, w2d, scale, shift)

    # Output is already NCHW-ordered; slicing is a no-op when Cout%8==0, HW%128==0.
    return out[:, :Cout, :HW].reshape(N, Cout, H, W)


if __name__ == "__main__":
    key = jax.random.PRNGKey(0)
    k_x, k_w = jax.random.split(key)

    # Small shapes consistent with the module: N=2, Cin=4, Cout=8, H=W=16.
    N, Cin, Cout, H, W = 2, 4, 8, 16, 16
    x = jax.random.normal(k_x, (N, Cin, H, W), dtype=jnp.float32)
    weight = 0.1 * jax.random.normal(k_w, (Cout, Cin, KH, KW), dtype=jnp.float32)

    def reference(x_in, w_in):
        conv = lax.conv_general_dilated(
            x_in, w_in, window_strides=(1, 1), padding=((1, 1), (1, 1)),
            dimension_numbers=("NCHW", "OIHW", "NCHW"),
            preferred_element_type=jnp.float32)
        m = jnp.mean(conv, axis=(0, 2, 3), keepdims=True)
        v = jnp.mean((conv - m) ** 2, axis=(0, 2, 3), keepdims=True)
        return jnp.maximum((conv - m) * lax.rsqrt(v + EPS), 0.0)

    ref = reference(x, weight)

    # 1) default dispatch: single fused pass (whole activation held in VMEM).
    out1 = jax.block_until_ready(basic_layer(x, weight))
    assert out1.shape == (N, Cout, H, W)
    assert jnp.allclose(out1, ref, atol=2e-3, rtol=2e-3)

    # 2) general two-pass path (stats sweep + recompute/normalize sweep).
    out2 = jax.block_until_ready(basic_layer(x, weight, force_two_pass=True))
    assert jnp.allclose(out2, ref, atol=2e-3, rtol=2e-3)

    # 3) bf16-operand path (halves patch bandwidth; f32 MXU accumulation),
    #    checked against a reference built from the same bf16-rounded operands.
    out3 = jax.block_until_ready(
        basic_layer(x, weight, operand_dtype=jnp.bfloat16, force_two_pass=True))
    ref_bf = reference(x.astype(jnp.bfloat16), weight.astype(jnp.bfloat16))
    assert jnp.allclose(out3, ref_bf, atol=2e-3, rtol=2e-3)

    print("KERNEL_OK")
</pallas_src>

<mosaic_0001>
module attributes {stable_mosaic.version = 11 : i64} {
  func.func @_fused_single_kernel(%arg0: i32, %arg1: memref<2x40x256xf32, #tpu.memory_space<vmem>>, %arg2: memref<8x40xf32, #tpu.memory_space<vmem>>, %arg3: memref<2x8x256xf32, #tpu.memory_space<vmem>>, %arg4: memref<2x8x256xf32, #tpu.memory_space<vmem>>) attributes {dimension_semantics = [#tpu.dimension_semantics<arbitrary>], iteration_bounds = array<i64: 1>, scalar_prefetch = 0 : i64, scratch_operands = 1 : i64, tpu.core_type = #tpu.core_type<tc>, window_params = [{pipeline_mode = #tpu.pipeline_mode<synchronous>, transform_indices = @transform_0, window_bounds = array<i64: 2, 40, 256>}, {pipeline_mode = #tpu.pipeline_mode<synchronous>, transform_indices = @transform_1, window_bounds = array<i64: 8, 40>}, {pipeline_mode = #tpu.pipeline_mode<synchronous>, transform_indices = @transform_2, window_bounds = array<i64: 2, 8, 256>}]} {
    %cst = arith.constant 0.000000e+00 : f32
    %0 = vector.broadcast %cst : f32 to vector<8x1xf32>
    %c0 = arith.constant 0 : index
    %c0_0 = arith.constant 0 : index
    %1 = vector.load %arg2[%c0, %c0_0] : memref<8x40xf32, #tpu.memory_space<vmem>>, vector<8x40xf32>
    %c0_1 = arith.constant 0 : index
    %c0_2 = arith.constant 0 : index
    %c0_3 = arith.constant 0 : index
    %2 = vector.load %arg1[%c0_1, %c0_2, %c0_3] : memref<2x40x256xf32, #tpu.memory_space<vmem>>, vector<1x40x256xf32>
    %3 = vector.shape_cast %2 : vector<1x40x256xf32> to vector<40x256xf32>
    %cst_4 = arith.constant dense<0.000000e+00> : vector<8x256xf32>
    %4 = tpu.matmul %1, %3, %cst_4 {dimension_numbers = #tpu.dot_dimension_numbers<[1], [0], [0], [1], [0, 0, 1, 1], [], []>} : vector<8x40xf32>, vector<40x256xf32>, vector<8x256xf32> -> vector<8x256xf32>
    %c0_5 = arith.constant 0 : index
    %c0_6 = arith.constant 0 : index
    %c0_7 = arith.constant 0 : index
    %5 = vector.load %arg4[%c0_5, %c0_6, %c0_7] : memref<2x8x256xf32, #tpu.memory_space<vmem>>, vector<1x8x256xf32>
    %6 = vector.shape_cast %5 : vector<1x8x256xf32> to vector<8x256xf32>
    %7 = vector.shape_cast %4 : vector<8x256xf32> to vector<1x8x256xf32>
    tpu.vector_store %arg4[%c0_5, %c0_6, %c0_7], %7 {strides = array<i32>} : memref<2x8x256xf32, #tpu.memory_space<vmem>>, vector<1x8x256xf32>,
    %cst_8 = arith.constant dense<0.000000e+00> : vector<8xf32>
    %8 = vector.multi_reduction <add>, %4, %cst_8 [1] : vector<8x256xf32> to vector<8xf32>
    %9 = vector.shape_cast %8 : vector<8xf32> to vector<8x1xf32>
    %10 = arith.addf %0, %9 : vector<8x1xf32>
    %c0_9 = arith.constant 0 : index
    %c0_10 = arith.constant 0 : index
    %11 = vector.load %arg2[%c0_9, %c0_10] : memref<8x40xf32, #tpu.memory_space<vmem>>, vector<8x40xf32>
    %c1 = arith.constant 1 : index
    %c0_11 = arith.constant 0 : index
    %c0_12 = arith.constant 0 : index
    %12 = vector.load %arg1[%c1, %c0_11, %c0_12] : memref<2x40x256xf32, #tpu.memory_space<vmem>>, vector<1x40x256xf32>
    %13 = vector.shape_cast %12 : vector<1x40x256xf32> to vector<40x256xf32>
    %cst_13 = arith.constant dense<0.000000e+00> : vector<8x256xf32>
    %14 = tpu.matmul %11, %13, %cst_13 {dimension_numbers = #tpu.dot_dimension_numbers<[1], [0], [0], [1], [0, 0, 1, 1], [], []>} : vector<8x40xf32>, vector<40x256xf32>, vector<8x256xf32> -> vector<8x256xf32>
    %c1_14 = arith.constant 1 : index
    %c0_15 = arith.constant 0 : index
    %c0_16 = arith.constant 0 : index
    %15 = vector.load %arg4[%c1_14, %c0_15, %c0_16] : memref<2x8x256xf32, #tpu.memory_space<vmem>>, vector<1x8x256xf32>
    %16 = vector.shape_cast %15 : vector<1x8x256xf32> to vector<8x256xf32>
    %17 = vector.shape_cast %14 : vector<8x256xf32> to vector<1x8x256xf32>
    tpu.vector_store %arg4[%c1_14, %c0_15, %c0_16], %17 {strides = array<i32>} : memref<2x8x256xf32, #tpu.memory_space<vmem>>, vector<1x8x256xf32>,
    %cst_17 = arith.constant dense<0.000000e+00> : vector<8xf32>
    %18 = vector.multi_reduction <add>, %14, %cst_17 [1] : vector<8x256xf32> to vector<8xf32>
    %19 = vector.shape_cast %18 : vector<8xf32> to vector<8x1xf32>
    %20 = arith.addf %10, %19 : vector<8x1xf32>
    %cst_18 = arith.constant 5.120000e+02 : f32
    %21 = vector.broadcast %cst_18 : f32 to vector<8x1xf32>
    %22 = arith.divf %20, %21 : vector<8x1xf32>
    %cst_19 = arith.constant 0.000000e+00 : f32
    %23 = vector.broadcast %cst_19 : f32 to vector<8x1xf32>
    %c0_20 = arith.constant 0 : index
    %c0_21 = arith.constant 0 : index
    %c0_22 = arith.constant 0 : index
    %24 = vector.load %arg4[%c0_20, %c0_21, %c0_22] : memref<2x8x256xf32, #tpu.memory_space<vmem>>, vector<1x8x256xf32>
    %25 = vector.shape_cast %24 : vector<1x8x256xf32> to vector<8x256xf32>
    %26 = vector.broadcast %22 : vector<8x1xf32> to vector<8x256xf32>
    %27 = arith.subf %25, %26 : vector<8x256xf32>
    %28 = arith.mulf %27, %27 : vector<8x256xf32>
    %cst_23 = arith.constant dense<0.000000e+00> : vector<8xf32>
    %29 = vector.multi_reduction <add>, %28, %cst_23 [1] : vector<8x256xf32> to vector<8xf32>
    %30 = vector.shape_cast %29 : vector<8xf32> to vector<8x1xf32>
    %31 = arith.addf %23, %30 : vector<8x1xf32>
    %c1_24 = arith.constant 1 : index
    %c0_25 = arith.constant 0 : index
    %c0_26 = arith.constant 0 : index
    %32 = vector.load %arg4[%c1_24, %c0_25, %c0_26] : memref<2x8x256xf32, #tpu.memory_space<vmem>>, vector<1x8x256xf32>
    %33 = vector.shape_cast %32 : vector<1x8x256xf32> to vector<8x256xf32>
    %34 = vector.broadcast %22 : vector<8x1xf32> to vector<8x256xf32>
    %35 = arith.subf %33, %34 : vector<8x256xf32>
    %36 = arith.mulf %35, %35 : vector<8x256xf32>
    %cst_27 = arith.constant dense<0.000000e+00> : vector<8xf32>
    %37 = vector.multi_reduction <add>, %36, %cst_27 [1] : vector<8x256xf32> to vector<8xf32>
    %38 = vector.shape_cast %37 : vector<8xf32> to vector<8x1xf32>
    %39 = arith.addf %31, %38 : vector<8x1xf32>
    %cst_28 = arith.constant 0.000000e+00 : f32
    %40 = vector.broadcast %cst_28 : f32 to vector<8x1xf32>
    %41 = arith.mulf %40, %22 : vector<8x1xf32>
    %42 = arith.mulf %41, %22 : vector<8x1xf32>
    %43 = arith.subf %39, %42 : vector<8x1xf32>
    %cst_29 = arith.constant 5.120000e+02 : f32
    %44 = vector.broadcast %cst_29 : f32 to vector<8x1xf32>
    %45 = arith.divf %43, %44 : vector<8x1xf32>
    %cst_30 = arith.constant 9.99999974E-6 : f32
    %46 = vector.broadcast %cst_30 : f32 to vector<8x1xf32>
    %47 = arith.addf %45, %46 : vector<8x1xf32>
    %48 = math.rsqrt %47 : vector<8x1xf32>
    %cst_31 = arith.constant 0.000000e+00 : f32
    %49 = vector.broadcast %cst_31 : f32 to vector<8x1xf32>
    %50 = arith.subf %49, %22 : vector<8x1xf32>
    %51 = arith.mulf %50, %48 : vector<8x1xf32>
    %c0_32 = arith.constant 0 : index
    %c0_33 = arith.constant 0 : index
    %c0_34 = arith.constant 0 : index
    %52 = vector.load %arg4[%c0_32, %c0_33, %c0_34] : memref<2x8x256xf32, #tpu.memory_space<vmem>>, vector<1x8x256xf32>
    %53 = vector.shape_cast %52 : vector<1x8x256xf32> to vector<8x256xf32>
    %54 = vector.broadcast %48 : vector<8x1xf32> to vector<8x256xf32>
    %55 = arith.mulf %53, %54 : vector<8x256xf32>
    %56 = vector.broadcast %51 : vector<8x1xf32> to vector<8x256xf32>
    %57 = arith.addf %55, %56 : vector<8x256xf32>
    %cst_35 = arith.constant 0.000000e+00 : f32
    %58 = vector.broadcast %cst_35 : f32 to vector<8x256xf32>
    %59 = arith.maximumf %57, %58 : vector<8x256xf32>
    %c0_36 = arith.constant 0 : index
    %c0_37 = arith.constant 0 : index
    %c0_38 = arith.constant 0 : index
    %60 = vector.load %arg3[%c0_36, %c0_37, %c0_38] : memref<2x8x256xf32, #tpu.memory_space<vmem>>, vector<1x8x256xf32>
    %61 = vector.shape_cast %60 : vector<1x8x256xf32> to vector<8x256xf32>
    %62 = vector.shape_cast %59 : vector<8x256xf32> to vector<1x8x256xf32>
    tpu.vector_store %arg3[%c0_36, %c0_37, %c0_38], %62 {strides = array<i32>} : memref<2x8x256xf32, #tpu.memory_space<vmem>>, vector<1x8x256xf32>,
    %c1_39 = arith.constant 1 : index
    %c0_40 = arith.constant 0 : index
    %c0_41 = arith.constant 0 : index
    %63 = vector.load %arg4[%c1_39, %c0_40, %c0_41] : memref<2x8x256xf32, #tpu.memory_space<vmem>>, vector<1x8x256xf32>
    %64 = vector.shape_cast %63 : vector<1x8x256xf32> to vector<8x256xf32>
    %65 = vector.broadcast %48 : vector<8x1xf32> to vector<8x256xf32>
    %66 = arith.mulf %64, %65 : vector<8x256xf32>
    %67 = vector.broadcast %51 : vector<8x1xf32> to vector<8x256xf32>
    %68 = arith.addf %66, %67 : vector<8x256xf32>
    %cst_42 = arith.constant 0.000000e+00 : f32
    %69 = vector.broadcast %cst_42 : f32 to vector<8x256xf32>
    %70 = arith.maximumf %68, %69 : vector<8x256xf32>
    %c1_43 = arith.constant 1 : index
    %c0_44 = arith.constant 0 : index
    %c0_45 = arith.constant 0 : index
    %71 = vector.load %arg3[%c1_43, %c0_44, %c0_45] : memref<2x8x256xf32, #tpu.memory_space<vmem>>, vector<1x8x256xf32>
    %72 = vector.shape_cast %71 : vector<1x8x256xf32> to vector<8x256xf32>
    %73 = vector.shape_cast %70 : vector<8x256xf32> to vector<1x8x256xf32>
    tpu.vector_store %arg3[%c1_43, %c0_44, %c0_45], %73 {strides = array<i32>} : memref<2x8x256xf32, #tpu.memory_space<vmem>>, vector<1x8x256xf32>,
    return
  }
  func.func @transform_0(%arg0: i32) -> (i32, i32, i32) {
    %c0_i32 = arith.constant 0 : i32
    %c0_i32_0 = arith.constant 0 : i32
    %c0_i32_1 = arith.constant 0 : i32
    %c0_i32_2 = arith.constant 0 : i32
    return %c0_i32, %c0_i32_0, %c0_i32_1 : i32, i32, i32
  }
  func.func @transform_1(%arg0: i32) -> (i32, i32) {
    %c0_i32 = arith.constant 0 : i32
    %c0_i32_0 = arith.constant 0 : i32
    %c0_i32_1 = arith.constant 0 : i32
    return %c0_i32, %c0_i32_0 : i32, i32
  }
  func.func @transform_2(%arg0: i32) -> (i32, i32, i32) {
    %c0_i32 = arith.constant 0 : i32
    %c0_i32_0 = arith.constant 0 : i32
    %c0_i32_1 = arith.constant 0 : i32
    %c0_i32_2 = arith.constant 0 : i32
    return %c0_i32, %c0_i32_0, %c0_i32_1 : i32, i32, i32
  }
}

</mosaic_0001>

<llo_original>
// kernel: tpu_custom_call.1
$region0: #{tpu_custom_call.1}
  #allocation0 [shape = 'u32[]', space=smem, size = 0x4, offset = 0x4, fixed_abs, tag = 'smem constant byte address 0x4 - core index']
  #allocation1 [shape = 'u32[144,128]{1,0:T(1,128)}', space=vmem, size = 0x12000, scoped, tag = 'internal scratch']
  #allocation2 [shape = 'f32[2,8,256]{2,1,0:T(8,128)}', space=vmem, size = 0x4000, scoped, tag = 'scratch operand']
  %s0 = inlined_call_operand.hbm [shape: f32[2,40,256], index: 0, kind: input, shape index: {}]
  %s1 = inlined_call_operand.hbm [shape: f32[8,40], index: 1, kind: input, shape index: {}]
  %s2 = inlined_call_operand.hbm [shape: f32[2,8,256], index: 2, kind: output, shape index: {}]
  %s3 = sld [smem:[#allocation0]]
  $region26: #{tpu_custom_call.1} parent=0
    _
  %s5 = ssub.s32 1, %s3
  %s6 = scalar_select 0, %s5, %s3
  $region1: #{tpu_custom_call.1} parent=0
    #allocation3 [shape = 'u8[81920]{0}', space=vmem, size = 0x14000, scoped, tag = 'input window, operand 0, single buffered']
    #allocation4 [shape = 's32[1]{0}', space=sflag, size = 0x4, scoped, tag = 'scoped memory for tpu_custom_call.1']
    #allocation5 [shape = 's32[1]{0}', space=sflag, size = 0x4, scoped, tag = 'scoped memory for tpu_custom_call.1']
    #allocation6 [shape = 'u8[4096]{0}', space=vmem, size = 0x1000, scoped, tag = 'input window, operand 1, single buffered']
    #allocation7 [shape = 's32[1]{0}', space=sflag, size = 0x4, scoped, tag = 'scoped memory for tpu_custom_call.1']
    #allocation8 [shape = 'u8[16384]{0}', space=vmem, size = 0x4000, scoped, tag = 'output window, operand 0, single buffered']
    %7 = vsyncpa [#allocation4], 0
    %8 = vsyncpa [#allocation7], 0
    %9 = vsyncpa [#allocation5], 0
    // Predicated region
    $region2: #{tpu_custom_call.1} parent=1 // pred_check
      _
    $region3: #{tpu_custom_call.1} parent=1 // pred_check_branch
      %11 = sbr.rel (0) target = $region5
    $region4: #{tpu_custom_call.1} parent=1 // pred_region
      %s13 = ssub.s32 2560, 2560
      %14 = vsyncadd [#allocation4], %s13
      %s15 = sshll.u32 [#allocation3], 4
      %s16 = int_to_ptr.vmem [resolvable:$true] %s15
      %21 = dma.hbm_to_vmem [thread:$0]  %s0, 2560, %s16, [#allocation4], 256, 256, 16
    $region5: #{tpu_custom_call.1} parent=1 // pred_fallthru
      _
    // Predicated region
    $region6: #{tpu_custom_call.1} parent=1 // pred_check
      _
    $region7: #{tpu_custom_call.1} parent=1 // pred_check_branch
      %23 = sbr.rel (0) target = $region9
    $region8: #{tpu_custom_call.1} parent=1 // pred_region
      %s25 = ssub.s32 128, 128
      %26 = vsyncadd [#allocation7], %s25
      %s28 = sshll.u32 [#allocation6], 4
      %s29 = int_to_ptr.vmem [resolvable:$true] %s28
      %31 = dma.hbm_to_vmem [thread:$0]  %s1, 128, %s29, [#allocation7]
    $region9: #{tpu_custom_call.1} parent=1 // pred_fallthru
      _
    // Predicated region
    $region10: #{tpu_custom_call.1} parent=1 // pred_check
      _
    $region11: #{tpu_custom_call.1} parent=1 // pred_check_branch
      %33 = sbr.rel (0) target = $region13
    $region12: #{tpu_custom_call.1} parent=1 // pred_region
      %34 = dma.done [#allocation4], 2560
    $region13: #{tpu_custom_call.1} parent=1 // pred_fallthru
      _
    // Predicated region
    $region14: #{tpu_custom_call.1} parent=1 // pred_check
      _
    $region15: #{tpu_custom_call.1} parent=1 // pred_check_branch
      %36 = sbr.rel (0) target = $region17
    $region16: #{tpu_custom_call.1} parent=1 // pred_region
      %37 = dma.done [#allocation7], 128
    $region17: #{tpu_custom_call.1} parent=1 // pred_fallthru
      _
    %v38 = vld [vmem:[#allocation6] sm:$0xff]
    %v39 = vld [vmem:[#allocation3] sm:$0xff]
    %v40 = vld [vmem:[#allocation3 + $0x8] sm:$0xff]
    %v41 = vld [vmem:[#allocation3 + $0x10] sm:$0xff]
    %v42 = vld [vmem:[#allocation3 + $0x18] sm:$0xff]
    %v43 = vld [vmem:[#allocation3 + $0x20] sm:$0xff]
    %v44 = vld [vmem:[#allocation3 + $0x28] sm:$0xff]
    %v45 = vld [vmem:[#allocation3 + $0x30] sm:$0xff]
    %v46 = vld [vmem:[#allocation3 + $0x38] sm:$0xff]
    %v47 = vld [vmem:[#allocation3 + $0x40] sm:$0xff]
    %v48 = vld [vmem:[#allocation3 + $0x48] sm:$0xff]
    %vm49 = vcmask 326656
    %v51 = vsel %vm49, %v38, 0
    %53 = vmatprep.subr.mxu0 0.0
    %54 = vmatpush1.msra.mxu0 0.0
    %55 = vmatprep.subr.mxu0 0.0
    %56 = vmatpush1.msra.mxu0 0.0
    %57 = vmatprep.subr.mxu0 0.0
    %58 = vmatpush1.msra.mxu0 0.0
    %59 = vmatprep.subr.mxu0 0.0
    %60 = vmatpush1.msra.mxu0 0.0
    %61 = vmatprep.subr.mxu0 0.0
    %62 = vmatpush1.msra.mxu0 0.0
    %63 = vmatprep.subr.mxu0 0.0
    %64 = vmatpush1.msra.mxu0 0.0
    %65 = vmatprep.subr.mxu0 0.0
    %66 = vmatpush1.msra.mxu0 0.0
    %67 = vmatprep.subr.mxu0 0.0
    %68 = vmatpush1.msra.mxu0 0.0
    %69 = vmatprep.subr.mxu0 0.0
    %70 = vmatpush1.msra.mxu0 0.0
    %71 = vmatprep.subr.mxu0 0.0
    %72 = vmatpush1.msra.mxu0 0.0
    %73 = vmatprep.subr.mxu0 0.0
    %74 = vmatpush1.msra.mxu0 0.0
    %75 = vmatprep.subr.mxu0 %v48
    %76 = vmatpush1.msra.mxu0 %v47
    %77 = vmatprep.subr.mxu0 %v46
    %78 = vmatpush1.msra.mxu0 %v45
    %79 = vmatprep.subr.mxu0 %v44
    %80 = vmatpush1.msra.mxu0 %v43
    %81 = vmatprep.subr.mxu0 %v42
    %82 = vmatpush1.msra.mxu0 %v41
    %83 = vmatprep.subr.mxu0 %v40
    %84 = vmatpush1.msra.mxu0 %v39
    %85 = vmatprep.subr.mxu0 0.0
    %86 = vmatpush2.msra.mxu0 0.0
    %87 = vmatprep.subr.mxu0 0.0
    %88 = vmatpush2.msra.mxu0 0.0
    %89 = vmatprep.subr.mxu0 0.0
    %90 = vmatpush2.msra.mxu0 0.0
    %91 = vmatprep.subr.mxu0 0.0
    %92 = vmatpush2.msra.mxu0 0.0
    %93 = vmatprep.subr.mxu0 0.0
    %94 = vmatpush2.msra.mxu0 0.0
    %95 = vmatprep.subr.mxu0 0.0
    %96 = vmatpush2.msra.mxu0 0.0
    %97 = vmatprep.subr.mxu0 0.0
    %98 = vmatpush2.msra.mxu0 0.0
    %99 = vmatprep.subr.mxu0 0.0
    %100 = vmatpush2.msra.mxu0 0.0
    %101 = vmatprep.subr.mxu0 0.0
    %102 = vmatpush2.msra.mxu0 0.0
    %103 = vmatprep.subr.mxu0 0.0
    %104 = vmatpush2.msra.mxu0 0.0
    %105 = vmatprep.subr.mxu0 0.0
    %106 = vmatpush2.msra.mxu0 0.0
    %107 = vmatprep.subr.mxu0 0.0
    %108 = vmatpush2.msra.mxu0 0.0
    %109 = vmatprep.subr.mxu0 0.0
    %110 = vmatpush2.msra.mxu0 0.0
    %111 = vmatprep.subr.mxu0 0.0
    %112 = vmatpush2.msra.mxu0 0.0
    %113 = vmatprep.subr.mxu0 0.0
    %114 = vmatpush2.msra.mxu0 0.0
    %115 = vmatprep.subr.mxu0 0.0
    %116 = vmatpush2.msra.mxu0 0.0
    %117 = vmatprep.mubr.f32.mxu0 0.0
    %118 = vmatmul.mubr.f32.gmra.mxu0 %v51
    %v119 = vpop.f32.mrf.mxu0
    %v120 = vadd.f32 0.0, %v119
    %v121 = vpop.f32.mrf.mxu0
    %v122 = vadd.f32 0.0, %v121
    %123 = vdwg.mxu0
    %124 = vst [vmem:[#allocation2] sm:$0xff] %v120
    %125 = vst [vmem:[#allocation2 + $0x8] sm:$0xff] %v122
    %v126 = vadd.f32 %v120, %v122
    %127 = vadd.xlane.f32.xlu0 %v126
    %v128 = vpop.xlane.xlu0 %127
    %v129 = vadd.f32 %v128, 0.0
    %v130 = vld [vmem:[#allocation6] sm:$0xff]
    %s131 = scalar_lea.vmem [#allocation3], 80
    %v132 = vld [vmem:[%s131] sm:$0xff]
    %v133 = vld [vmem:[%s131 + $0x8] sm:$0xff]
    %v134 = vld [vmem:[%s131 + $0x10] sm:$0xff]
    %v135 = vld [vmem:[%s131 + $0x18] sm:$0xff]
    %v136 = vld [vmem:[%s131 + $0x20] sm:$0xff]
    %v137 = vld [vmem:[%s131 + $0x28] sm:$0xff]
    %v138 = vld [vmem:[%s131 + $0x30] sm:$0xff]
    %v139 = vld [vmem:[%s131 + $0x38] sm:$0xff]
    %v140 = vld [vmem:[%s131 + $0x40] sm:$0xff]
    %v141 = vld [vmem:[%s131 + $0x48] sm:$0xff]
    %v143 = vsel %vm49, %v130, 0
    %145 = vmatprep.subr.mxu0 0.0
    %146 = vmatpush1.msra.mxu0 0.0
    %147 = vmatprep.subr.mxu0 0.0
    %148 = vmatpush1.msra.mxu0 0.0
    %149 = vmatprep.subr.mxu0 0.0
    %150 = vmatpush1.msra.mxu0 0.0
    %151 = vmatprep.subr.mxu0 0.0
    %152 = vmatpush1.msra.mxu0 0.0
    %153 = vmatprep.subr.mxu0 0.0
    %154 = vmatpush1.msra.mxu0 0.0
    %155 = vmatprep.subr.mxu0 0.0
    %156 = vmatpush1.msra.mxu0 0.0
    %157 = vmatprep.subr.mxu0 0.0
    %158 = vmatpush1.msra.mxu0 0.0
    %159 = vmatprep.subr.mxu0 0.0
    %160 = vmatpush1.msra.mxu0 0.0
    %161 = vmatprep.subr.mxu0 0.0
    %162 = vmatpush1.msra.mxu0 0.0
    %163 = vmatprep.subr.mxu0 0.0
    %164 = vmatpush1.msra.mxu0 0.0
    %165 = vmatprep.subr.mxu0 0.0
    %166 = vmatpush1.msra.mxu0 0.0
    %167 = vmatprep.subr.mxu0 %v141
    %168 = vmatpush1.msra.mxu0 %v140
    %169 = vmatprep.subr.mxu0 %v139
    %170 = vmatpush1.msra.mxu0 %v138
    %171 = vmatprep.subr.mxu0 %v137
    %172 = vmatpush1.msra.mxu0 %v136
    %173 = vmatprep.subr.mxu0 %v135
    %174 = vmatpush1.msra.mxu0 %v134
    %175 = vmatprep.subr.mxu0 %v133
    %176 = vmatpush1.msra.mxu0 %v132
    %177 = vmatprep.subr.mxu0 0.0
    %178 = vmatpush2.msra.mxu0 0.0
    %179 = vmatprep.subr.mxu0 0.0
    %180 = vmatpush2.msra.mxu0 0.0
    %181 = vmatprep.subr.mxu0 0.0
    %182 = vmatpush2.msra.mxu0 0.0
    %183 = vmatprep.subr.mxu0 0.0
    %184 = vmatpush2.msra.mxu0 0.0
    %185 = vmatprep.subr.mxu0 0.0
    %186 = vmatpush2.msra.mxu0 0.0
    %187 = vmatprep.subr.mxu0 0.0
    %188 = vmatpush2.msra.mxu0 0.0
    %189 = vmatprep.subr.mxu0 0.0
    %190 = vmatpush2.msra.mxu0 0.0
    %191 = vmatprep.subr.mxu0 0.0
    %192 = vmatpush2.msra.mxu0 0.0
    %193 = vmatprep.subr.mxu0 0.0
    %194 = vmatpush2.msra.mxu0 0.0
    %195 = vmatprep.subr.mxu0 0.0
    %196 = vmatpush2.msra.mxu0 0.0
    %197 = vmatprep.subr.mxu0 0.0
    %198 = vmatpush2.msra.mxu0 0.0
    %199 = vmatprep.subr.mxu0 0.0
    %200 = vmatpush2.msra.mxu0 0.0
    %201 = vmatprep.subr.mxu0 0.0
    %202 = vmatpush2.msra.mxu0 0.0
    %203 = vmatprep.subr.mxu0 0.0
    %204 = vmatpush2.msra.mxu0 0.0
    %205 = vmatprep.subr.mxu0 0.0
    %206 = vmatpush2.msra.mxu0 0.0
    %207 = vmatprep.subr.mxu0 0.0
    %208 = vmatpush2.msra.mxu0 0.0
    %209 = vmatprep.mubr.f32.mxu0 0.0
    %210 = vmatmul.mubr.f32.gmra.mxu0 %v143
    %v211 = vpop.f32.mrf.mxu0
    %v212 = vadd.f32 0.0, %v211
    %v213 = vpop.f32.mrf.mxu0
    %v214 = vadd.f32 0.0, %v213
    %215 = vdwg.mxu0
    %s216 = scalar_lea.vmem [#allocation2], 16
    %217 = vst [vmem:[%s216] sm:$0xff] %v212
    %218 = vst [vmem:[%s216 + $0x8] sm:$0xff] %v214
    %v219 = vadd.f32 %v212, %v214
    %220 = vadd.xlane.f32.xlu0 %v219
    %v221 = vpop.xlane.xlu0 %220
    %v222 = vadd.f32 %v129, %v221
    %v223 = vrcp.pop 512.0
    %v224 = vmul.f32 %v222, %v223
    %v225 = vld [vmem:[#allocation2] sm:$0xff]
    %v226 = vld [vmem:[#allocation2 + $0x8] sm:$0xff]
    %v227 = vsub.f32 %v225, %v224
    %v228 = vsub.f32 %v226, %v224
    %v229 = vmul.f32 %v227, %v227
    %v230 = vmul.f32 %v228, %v228
    %v231 = vadd.f32 %v229, %v230
    %232 = vadd.xlane.f32.xlu0 %v231
    %v233 = vpop.xlane.xlu0 %232
    %v234 = vadd.f32 %v233, 0.0
    %v235 = vld [vmem:[%s216] sm:$0xff]
    %v236 = vld [vmem:[%s216 + $0x8] sm:$0xff]
    %v237 = vsub.f32 %v235, %v224
    %v238 = vsub.f32 %v236, %v224
    %v239 = vmul.f32 %v237, %v237
    %v240 = vmul.f32 %v238, %v238
    %v241 = vadd.f32 %v239, %v240
    %242 = vadd.xlane.f32.xlu0 %v241
    %v243 = vpop.xlane.xlu0 %242
    %v244 = vadd.f32 %v234, %v243
    %v245 = vmul.f32 %v224, 0.0
    %v246 = vmul.f32 %v245, %v224
    %v247 = vsub.f32 %v244, %v246
    %v248 = vmul.f32 %v247, %v223
    %v249 = vadd.f32 %v248, 1e-05
    %v250 = vrsqrt.pop %v249
    %v251 = vsub.f32 0.0, %v224
    %v252 = vmul.f32 %v251, %v250
    %v253 = vmul.f32 %v225, %v250
    %v254 = vmul.f32 %v226, %v250
    %v255 = vadd.f32 %v253, %v252
    %v256 = vadd.f32 %v254, %v252
    %v257 = vmax.f32 %v255, 0.0
    %v258 = vmax.f32 %v256, 0.0
    %259 = vst [vmem:[#allocation8] sm:$0xff] %v257
    %260 = vst [vmem:[#allocation8 + $0x8] sm:$0xff] %v258
    %v261 = vld [vmem:[%s216] sm:$0xff]
    %v262 = vld [vmem:[%s216 + $0x8] sm:$0xff]
    %v263 = vmul.f32 %v261, %v250
    %v264 = vmul.f32 %v262, %v250
    %v265 = vadd.f32 %v263, %v252
    %v266 = vadd.f32 %v264, %v252
    %v267 = vmax.f32 %v265, 0.0
    %v268 = vmax.f32 %v266, 0.0
    %s269 = scalar_lea.vmem [#allocation8], 16
    %270 = vst [vmem:[%s269] sm:$0xff] %v267
    %271 = vst [vmem:[%s269 + $0x8] sm:$0xff] %v268
    // Predicated region
    $region18: #{tpu_custom_call.1} parent=1 // pred_check
      _
    $region19: #{tpu_custom_call.1} parent=1 // pred_check_branch
      %273 = sbr.rel (0) target = $region21
    $region20: #{tpu_custom_call.1} parent=1 // pred_region
      %s275 = ssub.s32 512, 512
      %276 = vsyncadd [#allocation5], %s275
      %s277 = sshll.u32 [#allocation8], 4
      %s278 = int_to_ptr.vmem [resolvable:$true] %s277
      %283 = dma.vmem_to_hbm [thread:$0]  %s278, 512, %s2, [#allocation5], 256, 256, 16
    $region21: #{tpu_custom_call.1} parent=1 // pred_fallthru
      _
    // Predicated region
    $region22: #{tpu_custom_call.1} parent=1 // pred_check
      _
    $region23: #{tpu_custom_call.1} parent=1 // pred_check_branch
      %285 = sbr.rel (0) target = $region25
    $region24: #{tpu_custom_call.1} parent=1 // pred_region
      %286 = dma.done [#allocation5], 512
    $region25: #{tpu_custom_call.1} parent=1 // pred_fallthru
      _
    %287 = vsyncpa [#allocation4], 1
    %288 = vsyncpa [#allocation7], 1
    %289 = vsyncpa [#allocation5], 1

</llo_original>
